<compile_context>
chip_gen: v7x
topology: tpu7x:2x2x1
jax: 0.10.0
libtpu: 0.0.40
codegen_flags: <defaults>
</compile_context>

<pallas_src>
import math

import jax
import jax.numpy as jnp
from jax.experimental import pallas as pl
from jax.experimental.pallas import tpu as pltpu


def _sampler_kernel(mean_ref, logvar_ref, eps_ref, z_ref):
    """z = mean + exp(0.5 * log_var) * eps, f32 math regardless of storage dtype."""
    mean = mean_ref[...].astype(jnp.float32)
    log_var = logvar_ref[...].astype(jnp.float32)
    eps = eps_ref[...].astype(jnp.float32)
    std = jnp.exp(log_var * 0.5)           # EUP slot -> hidden under the DMA stream.
    z_ref[...] = (mean + std * eps).astype(z_ref.dtype)  # VPU elementwise FMA.


def _pick_tiles(rows, lanes, itemsize, max_tile_bytes):
    """Largest (tr, tl) tile respecting the (8,128)/full-extent rules and budget."""
    # Lane (last) axis: full extent if it fits the budget with >= 8 sublanes,
    # otherwise the largest multiple of 128 that does.
    max_lane_elems = max(128, (max_tile_bytes // (8 * itemsize)) // 128 * 128)
    tl = lanes if lanes <= max_lane_elems else max_lane_elems

    # Sublane axis: as many rows as fit the per-operand budget (multiple of 8),
    # or the full extent when it is small enough.
    rows_budget = max(8, (max_tile_bytes // (tl * itemsize)) // 8 * 8)
    tr = rows if rows <= rows_budget else rows_budget

    # v7x has 2 TensorCores; "parallel" grid axes shard across them.  Avoid a
    # single-tile grid on mid/large inputs so one core is not left idle.
    total_bytes = rows * lanes * itemsize
    if tr == rows and tl == lanes and total_bytes > (2 << 20) and rows >= 16:
        n_blocks = min(4, rows // 8)
        tr = -(-rows // n_blocks)          # ceil
        tr = -(-tr // 8) * 8               # round up to a multiple of 8
    return tr, tl


def normal_sampler_forward(mean, log_var, key, *, return_epsilon=False,
                           max_tile_bytes=None, lane_width=512):
    """Reparameterization trick: z = mean + exp(0.5 * log_var) * N(0, 1)."""
    assert mean.shape == log_var.shape
    orig_shape = mean.shape
    out_dtype = mean.dtype
    itemsize = jnp.dtype(out_dtype).itemsize

    # epsilon drawn in the wrapper (matches torch.randn in the reference) in the
    # storage dtype so the extra HBM stream is as cheap as the inputs.
    eps = jax.random.normal(key, orig_shape, dtype=out_dtype)

    # ---- Generation-aware VMEM capacity ------------------------------------
    try:
        info = pltpu.get_tpu_info()
        vmem_cap = int(getattr(info, "vmem_capacity_bytes", 64 * 1024 * 1024))
    except Exception:  # non-TPU / interpret runs
        vmem_cap = 64 * 1024 * 1024        # conservative: v7x per-TC VMEM

    if max_tile_bytes is None:
        # Per element of a tile: 4 streams x 2 pipeline buffers at the storage
        # dtype + ~4 f32 in-kernel temporaries; keep it inside ~75% of VMEM.
        per_elem = 8 * itemsize + 4 * 4
        elems = max(1, (vmem_cap * 3 // 4) // per_elem)
        max_tile_bytes = max(512 * 1024, elems * itemsize)   # ~4 MiB v7x, ~8 MiB v5e/v6e

    # ---- Lane-dense 2-D slab ------------------------------------------------
    n = math.prod(orig_shape)
    if mean.ndim == 2 and orig_shape[-1] % 128 == 0:
        slab_shape = orig_shape
        pad = 0
    else:
        w = lane_width if n >= lane_width else 128
        rows = pl.cdiv(n, w)
        pad = rows * w - n
        slab_shape = (rows, w)

    def to_slab(x):
        if slab_shape == orig_shape:
            return x
        flat = x.reshape(-1)
        if pad:
            flat = jnp.pad(flat, (0, pad))
        return flat.reshape(slab_shape)

    mean2, logvar2, eps2 = to_slab(mean), to_slab(log_var), to_slab(eps)
    R, W = slab_shape

    tr, tl = _pick_tiles(R, W, itemsize, max_tile_bytes)
    grid = (pl.cdiv(R, tr), pl.cdiv(W, tl))
    tile_spec = pl.BlockSpec((tr, tl), lambda i, j: (i, j))

    # VMEM limit: double-buffered streams at storage dtype + f32 temporaries,
    # with headroom, capped at 85% of the device's actual VMEM.
    tile_bytes = tr * tl * itemsize
    needed = 4 * 2 * tile_bytes + 4 * (tr * tl * 4)
    vmem_limit = int(min(vmem_cap * 85 // 100,
                         max(32 * 1024 * 1024, needed * 5 // 4)))

    z2 = pl.pallas_call(
        _sampler_kernel,
        out_shape=jax.ShapeDtypeStruct(slab_shape, out_dtype),
        grid=grid,
        in_specs=[tile_spec, tile_spec, tile_spec],
        out_specs=tile_spec,
        compiler_params=pltpu.CompilerParams(
            dimension_semantics=("parallel", "parallel"),
            vmem_limit_bytes=vmem_limit,
        ),
    )(mean2, logvar2, eps2)

    z = z2 if slab_shape == orig_shape else z2.reshape(-1)[:n].reshape(orig_shape)

    if return_epsilon:
        return z, eps
    return z


if __name__ == "__main__":
    key = jax.random.PRNGKey(0)
    k_mean, k_logvar, k_eps1, k_eps2 = jax.random.split(key, 4)

    # Case 1: lane-aligned latent (D a multiple of 128).
    B, D = 16, 256
    mean = jax.random.normal(k_mean, (B, D), dtype=jnp.float32)
    log_var = jax.random.normal(k_logvar, (B, D), dtype=jnp.float32) * 0.1

    z, eps = normal_sampler_forward(mean, log_var, k_eps1, return_epsilon=True)
    jax.block_until_ready((z, eps))
    assert z.shape == (B, D) and eps.shape == (B, D)
    assert bool(jnp.all(jnp.isfinite(z)))
    z_ref = mean + jnp.exp(0.5 * log_var) * eps
    assert jnp.allclose(z, z_ref, atol=1e-5, rtol=1e-5)

    # Case 2: small non-multiple-of-128 latent -> exercises the lane-dense
    # flatten/pad path in the wrapper.
    B2, D2 = 8, 80
    mean2 = jax.random.normal(k_mean, (B2, D2), dtype=jnp.float32)
    log_var2 = jax.random.normal(k_logvar, (B2, D2), dtype=jnp.float32) * 0.1
    z2, eps2 = normal_sampler_forward(mean2, log_var2, k_eps2, return_epsilon=True)
    jax.block_until_ready(z2)
    assert z2.shape == (B2, D2)
    z2_ref = mean2 + jnp.exp(0.5 * log_var2) * eps2
    assert jnp.allclose(z2, z2_ref, atol=1e-5, rtol=1e-5)

    # Loose sanity on the Gaussian noise (4096 samples -> bounds are >10 sigma).
    assert abs(float(jnp.mean(eps))) < 0.2
    assert abs(float(jnp.std(eps)) - 1.0) < 0.2

    # Production path: single output.
    z_only = normal_sampler_forward(mean, log_var, k_eps1)
    jax.block_until_ready(z_only)
    assert z_only.shape == (B, D)

    print("KERNEL_OK")
</pallas_src>

<mosaic_0001>
module attributes {stable_mosaic.version = 11 : i64} {
  func.func @_sampler_kernel(%arg0: i32, %arg1: i32, %arg2: memref<16x256xf32, #tpu.memory_space<vmem>>, %arg3: memref<16x256xf32, #tpu.memory_space<vmem>>, %arg4: memref<16x256xf32, #tpu.memory_space<vmem>>, %arg5: memref<16x256xf32, #tpu.memory_space<vmem>>) attributes {dimension_semantics = [#tpu.dimension_semantics<parallel>, #tpu.dimension_semantics<parallel>], iteration_bounds = array<i64: 1, 1>, scalar_prefetch = 0 : i64, scratch_operands = 0 : i64, tpu.core_type = #tpu.core_type<tc>, window_params = [{transform_indices = @transform_0, window_bounds = array<i64: 16, 256>}, {transform_indices = @transform_1, window_bounds = array<i64: 16, 256>}, {transform_indices = @transform_2, window_bounds = array<i64: 16, 256>}, {transform_indices = @transform_3, window_bounds = array<i64: 16, 256>}]} {
    %c0 = arith.constant 0 : index
    %c0_0 = arith.constant 0 : index
    %0 = vector.load %arg2[%c0, %c0_0] : memref<16x256xf32, #tpu.memory_space<vmem>>, vector<16x256xf32>
    %c0_1 = arith.constant 0 : index
    %c0_2 = arith.constant 0 : index
    %1 = vector.load %arg3[%c0_1, %c0_2] : memref<16x256xf32, #tpu.memory_space<vmem>>, vector<16x256xf32>
    %c0_3 = arith.constant 0 : index
    %c0_4 = arith.constant 0 : index
    %2 = vector.load %arg4[%c0_3, %c0_4] : memref<16x256xf32, #tpu.memory_space<vmem>>, vector<16x256xf32>
    %cst = arith.constant 5.000000e-01 : f32
    %3 = vector.broadcast %cst : f32 to vector<16x256xf32>
    %4 = arith.mulf %1, %3 : vector<16x256xf32>
    %5 = math.exp %4 : vector<16x256xf32>
    %6 = arith.mulf %5, %2 : vector<16x256xf32>
    %7 = arith.addf %0, %6 : vector<16x256xf32>
    %c0_5 = arith.constant 0 : index
    %c0_6 = arith.constant 0 : index
    %8 = vector.load %arg5[%c0_5, %c0_6] : memref<16x256xf32, #tpu.memory_space<vmem>>, vector<16x256xf32>
    tpu.vector_store %arg5[%c0_5, %c0_6], %7 {strides = array<i32>} : memref<16x256xf32, #tpu.memory_space<vmem>>, vector<16x256xf32>,
    return
  }
  func.func @transform_0(%arg0: i32, %arg1: i32) -> (i32, i32) {
    %c0_i32 = arith.constant 0 : i32
    return %arg0, %arg1 : i32, i32
  }
  func.func @transform_1(%arg0: i32, %arg1: i32) -> (i32, i32) {
    %c0_i32 = arith.constant 0 : i32
    return %arg0, %arg1 : i32, i32
  }
  func.func @transform_2(%arg0: i32, %arg1: i32) -> (i32, i32) {
    %c0_i32 = arith.constant 0 : i32
    return %arg0, %arg1 : i32, i32
  }
  func.func @transform_3(%arg0: i32, %arg1: i32) -> (i32, i32) {
    %c0_i32 = arith.constant 0 : i32
    return %arg0, %arg1 : i32, i32
  }
}

</mosaic_0001>

<llo_original>
// kernel: tpu_custom_call.1
$region0: #{tpu_custom_call.1}
  #allocation0 [shape = 'u32[]', space=smem, size = 0x4, offset = 0x4, fixed_abs, tag = 'smem constant byte address 0x4 - core index']
  #allocation1 [shape = 'u32[144,128]{1,0:T(1,128)}', space=vmem, size = 0x12000, scoped, tag = 'internal scratch']
  %s0 = inlined_call_operand.hbm [shape: f32[16,256], index: 0, kind: input, shape index: {}]
  %s1 = inlined_call_operand.hbm [shape: f32[16,256], index: 1, kind: input, shape index: {}]
  %s2 = inlined_call_operand.hbm [shape: f32[16,256], index: 2, kind: input, shape index: {}]
  %s3 = inlined_call_operand.hbm [shape: f32[16,256], index: 3, kind: output, shape index: {}]
  %s4 = sld [smem:[#allocation0]]
  $region34: #{tpu_custom_call.1} parent=0
    _
  %s6 = ssub.s32 1, %s4
  %s7 = scalar_select 0, %s6, %s4
  $region1: #{tpu_custom_call.1} parent=0
    #allocation2 [shape = 'u8[16384]{0}', space=vmem, size = 0x4000, scoped, tag = 'input window, operand 0, single buffered']
    #allocation3 [shape = 's32[1]{0}', space=sflag, size = 0x4, scoped, tag = 'scoped memory for tpu_custom_call.1']
    #allocation4 [shape = 's32[1]{0}', space=sflag, size = 0x4, scoped, tag = 'scoped memory for tpu_custom_call.1']
    #allocation5 [shape = 'u8[16384]{0}', space=vmem, size = 0x4000, scoped, tag = 'input window, operand 1, single buffered']
    #allocation6 [shape = 's32[1]{0}', space=sflag, size = 0x4, scoped, tag = 'scoped memory for tpu_custom_call.1']
    #allocation7 [shape = 'u8[16384]{0}', space=vmem, size = 0x4000, scoped, tag = 'input window, operand 2, single buffered']
    #allocation8 [shape = 'u8[16384]{0}', space=vmem, size = 0x4000, scoped, tag = 'output window, operand 0, single buffered']
    %8 = vsyncpa [#allocation3], 0
    %9 = vsyncpa [#allocation6], 0
    %10 = vsyncpa [#allocation4], 0
    // Predicated region
    $region2: #{tpu_custom_call.1} parent=1 // pred_check
      _
    $region3: #{tpu_custom_call.1} parent=1 // pred_check_branch
      %12 = sbr.rel (0) target = $region5
    $region4: #{tpu_custom_call.1} parent=1 // pred_region
      %s14 = ssub.s32 512, 512
      %15 = vsyncadd [#allocation3], %s14
      %s16 = sshll.u32 [#allocation2], 4
      %s17 = int_to_ptr.vmem [resolvable:$true] %s16
      %22 = dma.hbm_to_vmem [thread:$0]  %s0, 512, %s17, [#allocation3], 256, 256, 16
    $region5: #{tpu_custom_call.1} parent=1 // pred_fallthru
      _
    // Predicated region
    $region6: #{tpu_custom_call.1} parent=1 // pred_check
      _
    $region7: #{tpu_custom_call.1} parent=1 // pred_check_branch
      %24 = sbr.rel (0) target = $region9
    $region8: #{tpu_custom_call.1} parent=1 // pred_region
      %s26 = ssub.s32 512, 512
      %27 = vsyncadd [#allocation6], %s26
      %s28 = sshll.u32 [#allocation5], 4
      %s29 = int_to_ptr.vmem [resolvable:$true] %s28
      %34 = dma.hbm_to_vmem [thread:$0]  %s1, 512, %s29, [#allocation6], 256, 256, 16
    $region9: #{tpu_custom_call.1} parent=1 // pred_fallthru
      _
    // Predicated region
    $region10: #{tpu_custom_call.1} parent=1 // pred_check
      _
    $region11: #{tpu_custom_call.1} parent=1 // pred_check_branch
      %36 = sbr.rel (0) target = $region13
    $region12: #{tpu_custom_call.1} parent=1 // pred_region
      %s38 = ssub.s32 512, 512
      %39 = vsyncadd [#allocation6], %s38
      %s40 = sshll.u32 [#allocation7], 4
      %s41 = int_to_ptr.vmem [resolvable:$true] %s40
      %46 = dma.hbm_to_vmem [thread:$0]  %s2, 512, %s41, [#allocation6], 256, 256, 16
    $region13: #{tpu_custom_call.1} parent=1 // pred_fallthru
      _
    // Predicated region
    $region14: #{tpu_custom_call.1} parent=1 // pred_check
      _
    $region15: #{tpu_custom_call.1} parent=1 // pred_check_branch
      %48 = sbr.rel (0) target = $region17
    $region16: #{tpu_custom_call.1} parent=1 // pred_region
      %49 = dma.done [#allocation3], 512
    $region17: #{tpu_custom_call.1} parent=1 // pred_fallthru
      _
    // Predicated region
    $region18: #{tpu_custom_call.1} parent=1 // pred_check
      _
    $region19: #{tpu_custom_call.1} parent=1 // pred_check_branch
      %51 = sbr.rel (0) target = $region21
    $region20: #{tpu_custom_call.1} parent=1 // pred_region
      %52 = dma.done [#allocation6], 512
    $region21: #{tpu_custom_call.1} parent=1 // pred_fallthru
      _
    // Predicated region
    $region22: #{tpu_custom_call.1} parent=1 // pred_check
      _
    $region23: #{tpu_custom_call.1} parent=1 // pred_check_branch
      %54 = sbr.rel (0) target = $region25
    $region24: #{tpu_custom_call.1} parent=1 // pred_region
      %55 = dma.done [#allocation6], 512
    $region25: #{tpu_custom_call.1} parent=1 // pred_fallthru
      _
    %v56 = vld [vmem:[#allocation2] sm:$0xff]
    %v57 = vld [vmem:[#allocation2 + $0x8] sm:$0xff]
    %v58 = vld [vmem:[#allocation2 + $0x10] sm:$0xff]
    %v59 = vld [vmem:[#allocation2 + $0x18] sm:$0xff]
    %v60 = vld [vmem:[#allocation5] sm:$0xff]
    %v61 = vld [vmem:[#allocation5 + $0x8] sm:$0xff]
    %v62 = vld [vmem:[#allocation5 + $0x10] sm:$0xff]
    %v63 = vld [vmem:[#allocation5 + $0x18] sm:$0xff]
    %v64 = vld [vmem:[#allocation7] sm:$0xff]
    %v65 = vld [vmem:[#allocation7 + $0x8] sm:$0xff]
    %v66 = vld [vmem:[#allocation7 + $0x10] sm:$0xff]
    %v67 = vld [vmem:[#allocation7 + $0x18] sm:$0xff]
    %v68 = vmul.f32 %v60, 0.5
    %v69 = vmul.f32 %v61, 0.5
    %v70 = vmul.f32 %v62, 0.5
    %v71 = vmul.f32 %v63, 0.5
    %v72 = vmul.f32 %v68, 1.442695
    %v73 = vpow.pop %v72
    %v74 = vmul.f32 %v69, 1.442695
    %v75 = vpow.pop %v74
    %v76 = vmul.f32 %v70, 1.442695
    %v77 = vpow.pop %v76
    %v78 = vmul.f32 %v71, 1.442695
    %v79 = vpow.pop %v78
    %v80 = vmul.f32 %v73, %v64
    %v81 = vmul.f32 %v75, %v65
    %v82 = vmul.f32 %v77, %v66
    %v83 = vmul.f32 %v79, %v67
    %v84 = vadd.f32 %v56, %v80
    %v85 = vadd.f32 %v57, %v81
    %v86 = vadd.f32 %v58, %v82
    %v87 = vadd.f32 %v59, %v83
    %88 = vst [vmem:[#allocation8] sm:$0xff] %v84
    %89 = vst [vmem:[#allocation8 + $0x8] sm:$0xff] %v85
    %90 = vst [vmem:[#allocation8 + $0x10] sm:$0xff] %v86
    %91 = vst [vmem:[#allocation8 + $0x18] sm:$0xff] %v87
    // Predicated region
    $region26: #{tpu_custom_call.1} parent=1 // pred_check
      _
    $region27: #{tpu_custom_call.1} parent=1 // pred_check_branch
      %93 = sbr.rel (0) target = $region29
    $region28: #{tpu_custom_call.1} parent=1 // pred_region
      %s95 = ssub.s32 512, 512
      %96 = vsyncadd [#allocation4], %s95
      %s97 = sshll.u32 [#allocation8], 4
      %s98 = int_to_ptr.vmem [resolvable:$true] %s97
      %103 = dma.vmem_to_hbm [thread:$0]  %s98, 512, %s3, [#allocation4], 256, 256, 16
    $region29: #{tpu_custom_call.1} parent=1 // pred_fallthru
      _
    // Predicated region
    $region30: #{tpu_custom_call.1} parent=1 // pred_check
      _
    $region31: #{tpu_custom_call.1} parent=1 // pred_check_branch
      %105 = sbr.rel (0) target = $region33
    $region32: #{tpu_custom_call.1} parent=1 // pred_region
      %106 = dma.done [#allocation4], 512
    $region33: #{tpu_custom_call.1} parent=1 // pred_fallthru
      _
    %107 = vsyncpa [#allocation3], 1
    %108 = vsyncpa [#allocation6], 1
    %109 = vsyncpa [#allocation4], 1

</llo_original>
